<compile_context>
chip_gen: v7x
topology: tpu7x:2x2x1
jax: 0.10.0
libtpu: 0.0.40
codegen_flags: <defaults>
</compile_context>

<pallas_src>
import functools

import jax
import jax.numpy as jnp
from jax.experimental import pallas as pl
from jax.experimental.pallas import tpu as pltpu


def _layernorm_kernel(x_ref, w_ref, b_ref, o_ref, *, eps, inv_h):
    # x_ref: (row_tile, H) in the input dtype; widen to f32 only in vregs.
    x = x_ref[...].astype(jnp.float32)
    u = jnp.sum(x, axis=-1, keepdims=True) * inv_h           # mean (XLU sum + const mul)
    xc = x - u
    s = jnp.sum(xc * xc, axis=-1, keepdims=True) * inv_h     # biased variance
    inv = jax.lax.rsqrt(s + eps)                             # eps inside sqrt (EUP)
    y = xc * inv
    # w_ref / b_ref are already f32 (1, H); broadcast against (row_tile, H).
    o_ref[...] = (w_ref[...] * y + b_ref[...]).astype(o_ref.dtype)


def _round_up(n, m):
    return (n + m - 1) // m * m


def bert_layer_norm(x, weight, bias, eps=1e-12, row_tile=None):
    """TF-style LayerNorm (eps inside sqrt). x: (..., hidden); weight/bias: (hidden,)."""
    orig_shape = x.shape
    hidden = orig_shape[-1]
    x2 = x.reshape(-1, hidden)
    rows = x2.shape[0]
    itemsize = jnp.dtype(x.dtype).itemsize

    if row_tile is None:
        # Largest row tile whose double-buffered (in + out) footprint fits a
        # ~24 MiB VMEM budget; capped at 2048 so the grid keeps many steps
        # (both TCs get work on v7x via the "parallel" grid axis).
        vmem_budget = 24 << 20
        rt = vmem_budget // (4 * hidden * itemsize)   # 2 buffers x (in + out)
        row_tile = max(8, min(2048, (rt // 8) * 8))
    # Never make the tile larger than the (8-aligned) row count.
    row_tile = max(8, _round_up(min(row_tile, _round_up(rows, 8)), 8))

    # Pad rows so the grid divides evenly. Rows are independent; padded rows
    # produce finite values that are sliced away below.
    padded_rows = _round_up(rows, row_tile)
    if padded_rows != rows:
        x2 = jnp.pad(x2, ((0, padded_rows - rows), (0, 0)))

    # Cast params to f32 once in the wrapper so no per-grid-step cast is emitted.
    w2 = weight.astype(jnp.float32).reshape(1, hidden)
    b2 = bias.astype(jnp.float32).reshape(1, hidden)

    kernel = functools.partial(
        _layernorm_kernel, eps=float(eps), inv_h=1.0 / float(hidden)
    )

    # Double-buffered x + out tiles, double-buffered (tiny) weight/bias, headroom.
    vmem_limit = 4 * row_tile * hidden * itemsize + 4 * hidden * 4 + (8 << 20)
    vmem_limit = int(min(max(vmem_limit, 16 << 20), 100 << 20))

    out = pl.pallas_call(
        kernel,
        out_shape=jax.ShapeDtypeStruct((padded_rows, hidden), x.dtype),
        grid_spec=pltpu.PrefetchScalarGridSpec(
            num_scalar_prefetch=0,
            grid=(padded_rows // row_tile,),
            in_specs=[
                pl.BlockSpec((row_tile, hidden), lambda i: (i, 0)),
                pl.BlockSpec((1, hidden), lambda i: (0, 0)),
                pl.BlockSpec((1, hidden), lambda i: (0, 0)),
            ],
            out_specs=pl.BlockSpec((row_tile, hidden), lambda i: (i, 0)),
        ),
        compiler_params=pltpu.CompilerParams(
            dimension_semantics=("parallel",),
            vmem_limit_bytes=vmem_limit,
        ),
    )(x2, w2, b2)

    if padded_rows != rows:
        out = out[:rows]
    return out.reshape(orig_shape)


def _reference(x, weight, bias, eps):
    u = jnp.mean(x, axis=-1, keepdims=True)
    s = jnp.mean((x - u) ** 2, axis=-1, keepdims=True)
    return weight * ((x - u) / jnp.sqrt(s + eps)) + bias


if __name__ == "__main__":
    key = jax.random.PRNGKey(0)

    # Small smoke-test shapes consistent with the module's forward.
    # NOTE: production BERT hidden sizes (768/1024) are lane-aligned; hidden=32
    # here is just a smoke test (block equals full array dim, so it is legal).
    batch, seq, hidden = 2, 8, 32
    x = jax.random.normal(key, (batch, seq, hidden), dtype=jnp.float32)
    weight = jnp.ones((hidden,), dtype=jnp.float32)   # matches nn.Parameter(ones)
    bias = jnp.zeros((hidden,), dtype=jnp.float32)    # matches nn.Parameter(zeros)

    out = bert_layer_norm(x, weight, bias, eps=1e-12)
    out = jax.block_until_ready(out)
    ref = _reference(x, weight, bias, 1e-12)
    assert jnp.allclose(out, ref, atol=1e-5, rtol=1e-5), "mismatch vs reference"

    # Second case exercising the non-divisible row count (padding) path.
    x2 = jax.random.normal(jax.random.PRNGKey(1), (3, 5, hidden), dtype=jnp.float32)
    out2 = jax.block_until_ready(bert_layer_norm(x2, weight, bias, eps=1e-12))
    ref2 = _reference(x2, weight, bias, 1e-12)
    assert jnp.allclose(out2, ref2, atol=1e-5, rtol=1e-5), "mismatch vs reference (padded)"

    # Third case: non-trivial weight/bias and bf16 input (widened to f32 in vregs).
    wb_key1, wb_key2, x_key = jax.random.split(jax.random.PRNGKey(2), 3)
    w3 = jax.random.normal(wb_key1, (hidden,), dtype=jnp.float32)
    b3 = jax.random.normal(wb_key2, (hidden,), dtype=jnp.float32)
    x3 = jax.random.normal(x_key, (4, 7, hidden), dtype=jnp.bfloat16)
    out3 = jax.block_until_ready(bert_layer_norm(x3, w3, b3, eps=1e-12))
    ref3 = _reference(x3.astype(jnp.float32), w3, b3, 1e-12).astype(jnp.bfloat16)
    assert jnp.allclose(
        out3.astype(jnp.float32), ref3.astype(jnp.float32), atol=3e-2, rtol=3e-2
    ), "mismatch vs reference (bf16)"

    print("KERNEL_OK")
</pallas_src>

<mosaic_0001>
module attributes {stable_mosaic.version = 11 : i64} {
  func.func @_layernorm_kernel(%arg0: i32, %arg1: memref<16x32xf32, #tpu.memory_space<vmem>>, %arg2: memref<1x32xf32, #tpu.memory_space<vmem>>, %arg3: memref<1x32xf32, #tpu.memory_space<vmem>>, %arg4: memref<16x32xf32, #tpu.memory_space<vmem>>) attributes {dimension_semantics = [#tpu.dimension_semantics<parallel>], iteration_bounds = array<i64: 1>, scalar_prefetch = 0 : i64, scratch_operands = 0 : i64, tpu.core_type = #tpu.core_type<tc>, window_params = [{transform_indices = @transform_0, window_bounds = array<i64: 16, 32>}, {pipeline_mode = #tpu.pipeline_mode<synchronous>, transform_indices = @transform_1, window_bounds = array<i64: 1, 32>}, {pipeline_mode = #tpu.pipeline_mode<synchronous>, transform_indices = @transform_2, window_bounds = array<i64: 1, 32>}, {transform_indices = @transform_3, window_bounds = array<i64: 16, 32>}]} {
    %c0 = arith.constant 0 : index
    %c0_0 = arith.constant 0 : index
    %0 = vector.load %arg1[%c0, %c0_0] : memref<16x32xf32, #tpu.memory_space<vmem>>, vector<16x32xf32>
    %cst = arith.constant dense<0.000000e+00> : vector<16xf32>
    %1 = vector.multi_reduction <add>, %0, %cst [1] : vector<16x32xf32> to vector<16xf32>
    %2 = vector.shape_cast %1 : vector<16xf32> to vector<16x1xf32>
    %cst_1 = arith.constant 3.125000e-02 : f32
    %3 = vector.broadcast %cst_1 : f32 to vector<16x1xf32>
    %4 = arith.mulf %2, %3 : vector<16x1xf32>
    %5 = vector.broadcast %4 : vector<16x1xf32> to vector<16x32xf32>
    %6 = arith.subf %0, %5 : vector<16x32xf32>
    %7 = arith.mulf %6, %6 : vector<16x32xf32>
    %cst_2 = arith.constant dense<0.000000e+00> : vector<16xf32>
    %8 = vector.multi_reduction <add>, %7, %cst_2 [1] : vector<16x32xf32> to vector<16xf32>
    %9 = vector.shape_cast %8 : vector<16xf32> to vector<16x1xf32>
    %cst_3 = arith.constant 3.125000e-02 : f32
    %10 = vector.broadcast %cst_3 : f32 to vector<16x1xf32>
    %11 = arith.mulf %9, %10 : vector<16x1xf32>
    %cst_4 = arith.constant 9.99999996E-13 : f32
    %12 = vector.broadcast %cst_4 : f32 to vector<16x1xf32>
    %13 = arith.addf %11, %12 : vector<16x1xf32>
    %14 = math.rsqrt %13 : vector<16x1xf32>
    %15 = vector.broadcast %14 : vector<16x1xf32> to vector<16x32xf32>
    %16 = arith.mulf %6, %15 : vector<16x32xf32>
    %c0_5 = arith.constant 0 : index
    %c0_6 = arith.constant 0 : index
    %17 = vector.load %arg2[%c0_5, %c0_6] : memref<1x32xf32, #tpu.memory_space<vmem>>, vector<1x32xf32>
    %18 = vector.broadcast %17 : vector<1x32xf32> to vector<16x32xf32>
    %19 = arith.mulf %18, %16 : vector<16x32xf32>
    %c0_7 = arith.constant 0 : index
    %c0_8 = arith.constant 0 : index
    %20 = vector.load %arg3[%c0_7, %c0_8] : memref<1x32xf32, #tpu.memory_space<vmem>>, vector<1x32xf32>
    %21 = vector.broadcast %20 : vector<1x32xf32> to vector<16x32xf32>
    %22 = arith.addf %19, %21 : vector<16x32xf32>
    %c0_9 = arith.constant 0 : index
    %c0_10 = arith.constant 0 : index
    %23 = vector.load %arg4[%c0_9, %c0_10] : memref<16x32xf32, #tpu.memory_space<vmem>>, vector<16x32xf32>
    tpu.vector_store %arg4[%c0_9, %c0_10], %22 {strides = array<i32>} : memref<16x32xf32, #tpu.memory_space<vmem>>, vector<16x32xf32>,
    return
  }
  func.func @transform_0(%arg0: i32) -> (i32, i32) {
    %c0_i32 = arith.constant 0 : i32
    %c0_i32_0 = arith.constant 0 : i32
    return %arg0, %c0_i32 : i32, i32
  }
  func.func @transform_1(%arg0: i32) -> (i32, i32) {
    %c0_i32 = arith.constant 0 : i32
    %c0_i32_0 = arith.constant 0 : i32
    %c0_i32_1 = arith.constant 0 : i32
    return %c0_i32, %c0_i32_0 : i32, i32
  }
  func.func @transform_2(%arg0: i32) -> (i32, i32) {
    %c0_i32 = arith.constant 0 : i32
    %c0_i32_0 = arith.constant 0 : i32
    %c0_i32_1 = arith.constant 0 : i32
    return %c0_i32, %c0_i32_0 : i32, i32
  }
  func.func @transform_3(%arg0: i32) -> (i32, i32) {
    %c0_i32 = arith.constant 0 : i32
    %c0_i32_0 = arith.constant 0 : i32
    return %arg0, %c0_i32 : i32, i32
  }
}

</mosaic_0001>

<llo_original>
// kernel: tpu_custom_call.1
$region0: #{tpu_custom_call.1}
  #allocation0 [shape = 'u32[]', space=smem, size = 0x4, offset = 0x4, fixed_abs, tag = 'smem constant byte address 0x4 - core index']
  #allocation1 [shape = 'u32[144,128]{1,0:T(1,128)}', space=vmem, size = 0x12000, scoped, tag = 'internal scratch']
  %s0 = inlined_call_operand.hbm [shape: f32[16,32], index: 0, kind: input, shape index: {}]
  %s1 = inlined_call_operand.vmem [shape: f32[1,32], index: 1, kind: input, shape index: {}]
  %s2 = inlined_call_operand.vmem [shape: f32[1,32], index: 2, kind: input, shape index: {}]
  %s3 = inlined_call_operand.hbm [shape: f32[16,32], index: 3, kind: output, shape index: {}]
  %s4 = sld [smem:[#allocation0]]
  $region26: #{tpu_custom_call.1} parent=0
    _
  %s6 = ssub.s32 1, %s4
  %s7 = scalar_select 0, %s6, %s4
  $region1: #{tpu_custom_call.1} parent=0
    #allocation2 [shape = 'u8[8192]{0}', space=vmem, size = 0x2000, scoped, tag = 'input window, operand 0, single buffered']
    #allocation3 [shape = 's32[1]{0}', space=sflag, size = 0x4, scoped, tag = 'scoped memory for tpu_custom_call.1']
    #allocation4 [shape = 's32[1]{0}', space=sflag, size = 0x4, scoped, tag = 'scoped memory for tpu_custom_call.1']
    #allocation5 [shape = 'u8[8192]{0}', space=vmem, size = 0x2000, scoped, tag = 'output window, operand 0, single buffered']
    %8 = vsyncpa [#allocation3], 0
    %9 = vsyncpa [#allocation4], 0
    // Predicated region
    $region2: #{tpu_custom_call.1} parent=1 // pred_check
      _
    $region3: #{tpu_custom_call.1} parent=1 // pred_check_branch
      %11 = sbr.rel (0) target = $region5
    $region4: #{tpu_custom_call.1} parent=1 // pred_region
      %s13 = ssub.s32 256, 256
      %14 = vsyncadd [#allocation3], %s13
      %s15 = sshll.u32 [#allocation2], 4
      %s16 = int_to_ptr.vmem [resolvable:$true] %s15
      %21 = dma.hbm_to_vmem [thread:$0]  %s0, 256, %s16, [#allocation3], 128, 128, 8
    $region5: #{tpu_custom_call.1} parent=1 // pred_fallthru
      _
    // Predicated region
    $region6: #{tpu_custom_call.1} parent=1 // pred_check
      _
    $region7: #{tpu_custom_call.1} parent=1 // pred_check_branch
      %23 = sbr.rel (0) target = $region9
    $region8: #{tpu_custom_call.1} parent=1 // pred_region
      _
    $region9: #{tpu_custom_call.1} parent=1 // pred_fallthru
      _
    // Predicated region
    $region10: #{tpu_custom_call.1} parent=1 // pred_check
      _
    $region11: #{tpu_custom_call.1} parent=1 // pred_check_branch
      %25 = sbr.rel (0) target = $region13
    $region12: #{tpu_custom_call.1} parent=1 // pred_region
      _
    $region13: #{tpu_custom_call.1} parent=1 // pred_fallthru
      _
    // Predicated region
    $region14: #{tpu_custom_call.1} parent=1 // pred_check
      _
    $region15: #{tpu_custom_call.1} parent=1 // pred_check_branch
      %27 = sbr.rel (0) target = $region17
    $region16: #{tpu_custom_call.1} parent=1 // pred_region
      %28 = dma.done [#allocation3], 256
    $region17: #{tpu_custom_call.1} parent=1 // pred_fallthru
      _
    %v29 = vld [vmem:[#allocation2] sm:$0xff]
    %v30 = vld [vmem:[#allocation2 + $0x8] sm:$0xff]
    %vm31 = vcmask 261120
    %v32 = vsel %vm31, %v29, 0.0
    %33 = vadd.xlane.f32.xlu0 %v32
    %v34 = vpop.xlane.xlu0 %33
    %v35 = vsel %vm31, %v30, 0.0
    %36 = vadd.xlane.f32.xlu0 %v35
    %v37 = vpop.xlane.xlu0 %36
    %v38 = vmul.f32 %v34, 0.03125
    %v39 = vmul.f32 %v37, 0.03125
    %v40 = vsub.f32 %v29, %v38
    %v41 = vsub.f32 %v30, %v39
    %v42 = vmul.f32 %v40, %v40
    %v43 = vmul.f32 %v41, %v41
    %v44 = vsel %vm31, %v42, 0.0
    %45 = vadd.xlane.f32.xlu0 %v44
    %v46 = vpop.xlane.xlu0 %45
    %v47 = vsel %vm31, %v43, 0.0
    %48 = vadd.xlane.f32.xlu0 %v47
    %v49 = vpop.xlane.xlu0 %48
    %v50 = vmul.f32 %v46, 0.03125
    %v51 = vmul.f32 %v49, 0.03125
    %v52 = vadd.f32 %v50, 1e-12
    %v53 = vadd.f32 %v51, 1e-12
    %v54 = vrsqrt.pop %v52
    %v55 = vrsqrt.pop %v53
    %v56 = vmul.f32 %v40, %v54
    %v57 = vmul.f32 %v41, %v55
    %v58 = vld [vmem:[%s1] sm:$0x1]
    %v60 = vlaneseq
    %v61 = vshrl.u32 %v60, 7
    %v62 = vsub.s32 0, %v61
    %v63 = vrot.slane %v58, %v62
    %v65 = vmul.f32 %v63, %v56
    %v66 = vmul.f32 %v63, %v57
    %v67 = vld [vmem:[%s2] sm:$0x1]
    %v69 = vlaneseq
    %v70 = vshrl.u32 %v69, 7
    %v71 = vsub.s32 0, %v70
    %v72 = vrot.slane %v67, %v71
    %v74 = vadd.f32 %v65, %v72
    %v75 = vadd.f32 %v66, %v72
    %76 = vst.msk [vmem:[#allocation5] sm:$0xff] %vm31, %v74
    %77 = vst.msk [vmem:[#allocation5 + $0x8] sm:$0xff] %vm31, %v75
    // Predicated region
    $region18: #{tpu_custom_call.1} parent=1 // pred_check
      _
    $region19: #{tpu_custom_call.1} parent=1 // pred_check_branch
      %79 = sbr.rel (0) target = $region21
    $region20: #{tpu_custom_call.1} parent=1 // pred_region
      %s81 = ssub.s32 256, 256
      %82 = vsyncadd [#allocation4], %s81
      %s83 = sshll.u32 [#allocation5], 4
      %s84 = int_to_ptr.vmem [resolvable:$true] %s83
      %89 = dma.vmem_to_hbm [thread:$0]  %s84, 256, %s3, [#allocation4], 128, 128, 8
    $region21: #{tpu_custom_call.1} parent=1 // pred_fallthru
      _
    // Predicated region
    $region22: #{tpu_custom_call.1} parent=1 // pred_check
      _
    $region23: #{tpu_custom_call.1} parent=1 // pred_check_branch
      %91 = sbr.rel (0) target = $region25
    $region24: #{tpu_custom_call.1} parent=1 // pred_region
      %92 = dma.done [#allocation4], 256
    $region25: #{tpu_custom_call.1} parent=1 // pred_fallthru
      _
    %93 = vsyncpa [#allocation3], 1
    %94 = vsyncpa [#allocation4], 1

</llo_original>
